<compile_context>
chip_gen: v7x
topology: tpu7x:2x2x1
jax: 0.10.0
libtpu: 0.0.40
codegen_flags: <defaults>
</compile_context>

<pallas_src>
import jax
import jax.numpy as jnp
from jax.experimental import pallas as pl
from jax.experimental.pallas import tpu as pltpu

_IN = 9          # board features
_HID = 128
_OUT = 81        # 9x9 Q-value grid
_OUT_PAD = 128   # lane-dense output width (zero-padded 81 -> 128)


def _mlp_kernel(x_ref, w1_ref, b1_ref, w2_ref, b2_ref, w3_ref, b3_ref, o_ref):
    bf16 = jnp.bfloat16
    x = x_ref[...].astype(bf16)                               # (TB, 9)
    h1 = jnp.dot(x, w1_ref[...],
                 preferred_element_type=jnp.float32) + b1_ref[...]
    h1 = jnp.maximum(h1, 0.0)                                 # (TB, 128) f32
    h2 = jnp.dot(h1.astype(bf16), w2_ref[...],
                 preferred_element_type=jnp.float32) + b2_ref[...]
    h2 = jnp.maximum(h2, 0.0)                                 # (TB, 128) f32
    out = jnp.dot(h2.astype(bf16), w3_ref[...],
                  preferred_element_type=jnp.float32) + b3_ref[...]
    o_ref[...] = out.astype(o_ref.dtype)                      # (TB, 128) unmasked vst


def _round_up(x, m):
    return (x + m - 1) // m * m


def _choose_tile(batch, block_b):
    """Pick the batch tile: as big as possible, but keep >= 2 grid blocks for
    large batches so v7x's two TensorCores both get work."""
    b8 = _round_up(batch, 8)
    tb = min(_round_up(block_b, 8), b8)
    if b8 > 256 and pl.cdiv(batch, tb) < 2:
        tb = _round_up(pl.cdiv(b8, 2), 8)
    return tb


def init_params(key):
    """PyTorch-layout params: nn.Linear U(-1/sqrt(fan_in), 1/sqrt(fan_in)) init,
    stored as (in_features, out_features) so x @ W + b == x @ W_t.T + b."""
    def linear(key, fan_in, fan_out):
        kw, kb = jax.random.split(key)
        bound = 1.0 / jnp.sqrt(float(fan_in))
        w = jax.random.uniform(kw, (fan_in, fan_out), jnp.float32, -bound, bound)
        b = jax.random.uniform(kb, (1, fan_out), jnp.float32, -bound, bound)
        return w, b

    k1, k2, k3 = jax.random.split(key, 3)
    w1, b1 = linear(k1, _IN, _HID)
    w2, b2 = linear(k2, _HID, _HID)
    w3, b3 = linear(k3, _HID, _OUT)
    return (w1, b1, w2, b2, w3, b3)


def prepare_params(params):
    """Pad + cast the f32 params into the kernel layout (one-time cost).
    w3/b3 are zero-padded 81 -> 128 so the kernel output is lane-dense."""
    w1, b1, w2, b2, w3, b3 = params
    w3p = jnp.zeros((_HID, _OUT_PAD), jnp.float32).at[:, :_OUT].set(w3)
    b3p = jnp.zeros((1, _OUT_PAD), jnp.float32).at[:, :_OUT].set(b3)
    return (w1.astype(jnp.bfloat16), b1.astype(jnp.float32),
            w2.astype(jnp.bfloat16), b2.astype(jnp.float32),
            w3p.astype(jnp.bfloat16), b3p.astype(jnp.float32))


def minimax_dqn_forward(state, kernel_params, *, block_b=2048):
    """state: (B, 9) float -> (B, 81) f32 (same semantics as minimaxDQN.forward)."""
    w1, b1, w2, b2, w3p, b3p = kernel_params
    state = state.astype(jnp.float32)
    B = state.shape[0]
    tb = _choose_tile(B, block_b)
    grid = (pl.cdiv(B, tb),)

    const = lambda shape: pl.BlockSpec(shape, lambda i: (0, 0))
    flops = 2 * B * (_IN * _HID + _HID * _HID + _HID * _OUT_PAD)
    bytes_accessed = (B * _IN * 4 + B * _OUT_PAD * 4
                      + (_IN * _HID + _HID * _HID + _HID * _OUT_PAD) * 2
                      + 3 * _HID * 4)

    out = pl.pallas_call(
        _mlp_kernel,
        out_shape=jax.ShapeDtypeStruct((B, _OUT_PAD), jnp.float32),
        grid=grid,
        in_specs=[
            pl.BlockSpec((tb, _IN), lambda i: (i, 0)),   # x: tiled over batch, ragged tail OK
            const((_IN, _HID)),                          # w1 (bf16), VMEM-resident
            const((1, _HID)),                            # b1 (f32)
            const((_HID, _HID)),                         # w2 (bf16)
            const((1, _HID)),                            # b2 (f32)
            const((_HID, _OUT_PAD)),                     # w3 (bf16, 81->128 padded)
            const((1, _OUT_PAD)),                        # b3 (f32, 81->128 padded)
        ],
        out_specs=pl.BlockSpec((tb, _OUT_PAD), lambda i: (i, 0)),
        compiler_params=pltpu.CompilerParams(
            dimension_semantics=("parallel",)),
        cost_estimate=pl.CostEstimate(
            flops=flops, transcendentals=0, bytes_accessed=bytes_accessed),
    )(state, w1, b1, w2, b2, w3p, b3p)

    # Drop the fake (zero) Q-value columns BEFORE any reshape/argmax so padded
    # actions can never be selected.  No batch slice needed: out has exactly B rows.
    return out[:, :_OUT]


def _reference_forward_f32(state, params):
    w1, b1, w2, b2, w3, b3 = params
    h1 = jnp.maximum(state @ w1 + b1, 0.0)
    h2 = jnp.maximum(h1 @ w2 + b2, 0.0)
    return h2 @ w3 + b3


def _reference_forward_bf16(state, params):
    """Reference with the same bf16-operand / f32-accumulate recipe as the kernel."""
    w1, b1, w2, b2, w3, b3 = params
    bf = jnp.bfloat16
    h1 = jnp.maximum(
        jnp.dot(state.astype(bf), w1.astype(bf),
                preferred_element_type=jnp.float32) + b1, 0.0)
    h2 = jnp.maximum(
        jnp.dot(h1.astype(bf), w2.astype(bf),
                preferred_element_type=jnp.float32) + b2, 0.0)
    return jnp.dot(h2.astype(bf), w3.astype(bf),
                   preferred_element_type=jnp.float32) + b3


if __name__ == "__main__":
    key = jax.random.PRNGKey(0)
    k_params, k_small, k_big = jax.random.split(key, 3)

    params = init_params(k_params)
    kparams = prepare_params(params)

    fwd = jax.jit(lambda s: minimax_dqn_forward(s, kparams))

    # Small serving-style batch: grid=(1,), TB=8, ragged-free.
    state_small = jax.random.normal(k_small, (8, _IN), jnp.float32)
    out_small = jax.block_until_ready(fwd(state_small))
    assert out_small.shape == (8, _OUT)

    # Replay-buffer-style batch: exercises the multi-block parallel grid
    # (tb clamped to 504 -> two blocks, second one ragged).
    state_big = jax.random.normal(k_big, (1000, _IN), jnp.float32)
    out_big = jax.block_until_ready(fwd(state_big))
    assert out_big.shape == (1000, _OUT)

    for state, out in ((state_small, out_small), (state_big, out_big)):
        ref_bf = _reference_forward_bf16(state, params)
        ref_f32 = _reference_forward_f32(state, params)
        assert jnp.allclose(out, ref_bf, atol=2e-3, rtol=2e-3), \
            float(jnp.max(jnp.abs(out - ref_bf)))
        assert jnp.allclose(out, ref_f32, atol=5e-2, rtol=5e-2), \
            float(jnp.max(jnp.abs(out - ref_f32)))

    # predict()'s (B, 81) -> (B, 9, 9) reshape is pure glue, done outside the
    # kernel on the already-sliced (padding-free) Q-values.
    _ = out_small.reshape((-1, 9, 9))

    print("KERNEL_OK")
</pallas_src>

<mosaic_0001>
module attributes {stable_mosaic.version = 11 : i64} {
  func.func @_mlp_kernel(%arg0: i32, %arg1: memref<8x9xf32, #tpu.memory_space<vmem>>, %arg2: memref<9x128xbf16, #tpu.memory_space<vmem>>, %arg3: memref<1x128xf32, #tpu.memory_space<vmem>>, %arg4: memref<128x128xbf16, #tpu.memory_space<vmem>>, %arg5: memref<1x128xf32, #tpu.memory_space<vmem>>, %arg6: memref<128x128xbf16, #tpu.memory_space<vmem>>, %arg7: memref<1x128xf32, #tpu.memory_space<vmem>>, %arg8: memref<8x128xf32, #tpu.memory_space<vmem>>) attributes {dimension_semantics = [#tpu.dimension_semantics<parallel>], iteration_bounds = array<i64: 1>, scalar_prefetch = 0 : i64, scratch_operands = 0 : i64, tpu.core_type = #tpu.core_type<tc>, window_params = [{transform_indices = @transform_0, window_bounds = array<i64: 8, 9>}, {pipeline_mode = #tpu.pipeline_mode<synchronous>, transform_indices = @transform_1, window_bounds = array<i64: 9, 128>}, {pipeline_mode = #tpu.pipeline_mode<synchronous>, transform_indices = @transform_2, window_bounds = array<i64: 1, 128>}, {pipeline_mode = #tpu.pipeline_mode<synchronous>, transform_indices = @transform_3, window_bounds = array<i64: 128, 128>}, {pipeline_mode = #tpu.pipeline_mode<synchronous>, transform_indices = @transform_4, window_bounds = array<i64: 1, 128>}, {pipeline_mode = #tpu.pipeline_mode<synchronous>, transform_indices = @transform_5, window_bounds = array<i64: 128, 128>}, {pipeline_mode = #tpu.pipeline_mode<synchronous>, transform_indices = @transform_6, window_bounds = array<i64: 1, 128>}, {transform_indices = @transform_7, window_bounds = array<i64: 8, 128>}]} {
    %c0 = arith.constant 0 : index
    %c0_0 = arith.constant 0 : index
    %0 = vector.load %arg1[%c0, %c0_0] : memref<8x9xf32, #tpu.memory_space<vmem>>, vector<8x9xf32>
    %1 = arith.truncf %0 : vector<8x9xf32> to vector<8x9xbf16>
    %c0_1 = arith.constant 0 : index
    %c0_2 = arith.constant 0 : index
    %2 = vector.load %arg2[%c0_1, %c0_2] : memref<9x128xbf16, #tpu.memory_space<vmem>>, vector<9x128xbf16>
    %cst = arith.constant dense<0.000000e+00> : vector<8x128xf32>
    %3 = tpu.matmul %1, %2, %cst {dimension_numbers = #tpu.dot_dimension_numbers<[1], [0], [0], [1], [0, 0, 1, 1], [], []>} : vector<8x9xbf16>, vector<9x128xbf16>, vector<8x128xf32> -> vector<8x128xf32>
    %c0_3 = arith.constant 0 : index
    %c0_4 = arith.constant 0 : index
    %4 = vector.load %arg3[%c0_3, %c0_4] : memref<1x128xf32, #tpu.memory_space<vmem>>, vector<1x128xf32>
    %5 = vector.broadcast %4 : vector<1x128xf32> to vector<8x128xf32>
    %6 = arith.addf %3, %5 : vector<8x128xf32>
    %cst_5 = arith.constant 0.000000e+00 : f32
    %7 = vector.broadcast %cst_5 : f32 to vector<8x128xf32>
    %8 = arith.maximumf %6, %7 : vector<8x128xf32>
    %9 = arith.truncf %8 : vector<8x128xf32> to vector<8x128xbf16>
    %c0_6 = arith.constant 0 : index
    %c0_7 = arith.constant 0 : index
    %10 = vector.load %arg4[%c0_6, %c0_7] : memref<128x128xbf16, #tpu.memory_space<vmem>>, vector<128x128xbf16>
    %cst_8 = arith.constant dense<0.000000e+00> : vector<8x128xf32>
    %11 = tpu.matmul %9, %10, %cst_8 {dimension_numbers = #tpu.dot_dimension_numbers<[1], [0], [0], [1], [0, 0, 1, 1], [], []>} : vector<8x128xbf16>, vector<128x128xbf16>, vector<8x128xf32> -> vector<8x128xf32>
    %c0_9 = arith.constant 0 : index
    %c0_10 = arith.constant 0 : index
    %12 = vector.load %arg5[%c0_9, %c0_10] : memref<1x128xf32, #tpu.memory_space<vmem>>, vector<1x128xf32>
    %13 = vector.broadcast %12 : vector<1x128xf32> to vector<8x128xf32>
    %14 = arith.addf %11, %13 : vector<8x128xf32>
    %cst_11 = arith.constant 0.000000e+00 : f32
    %15 = vector.broadcast %cst_11 : f32 to vector<8x128xf32>
    %16 = arith.maximumf %14, %15 : vector<8x128xf32>
    %17 = arith.truncf %16 : vector<8x128xf32> to vector<8x128xbf16>
    %c0_12 = arith.constant 0 : index
    %c0_13 = arith.constant 0 : index
    %18 = vector.load %arg6[%c0_12, %c0_13] : memref<128x128xbf16, #tpu.memory_space<vmem>>, vector<128x128xbf16>
    %cst_14 = arith.constant dense<0.000000e+00> : vector<8x128xf32>
    %19 = tpu.matmul %17, %18, %cst_14 {dimension_numbers = #tpu.dot_dimension_numbers<[1], [0], [0], [1], [0, 0, 1, 1], [], []>} : vector<8x128xbf16>, vector<128x128xbf16>, vector<8x128xf32> -> vector<8x128xf32>
    %c0_15 = arith.constant 0 : index
    %c0_16 = arith.constant 0 : index
    %20 = vector.load %arg7[%c0_15, %c0_16] : memref<1x128xf32, #tpu.memory_space<vmem>>, vector<1x128xf32>
    %21 = vector.broadcast %20 : vector<1x128xf32> to vector<8x128xf32>
    %22 = arith.addf %19, %21 : vector<8x128xf32>
    %c0_17 = arith.constant 0 : index
    %c0_18 = arith.constant 0 : index
    %23 = vector.load %arg8[%c0_17, %c0_18] : memref<8x128xf32, #tpu.memory_space<vmem>>, vector<8x128xf32>
    tpu.vector_store %arg8[%c0_17, %c0_18], %22 {strides = array<i32>} : memref<8x128xf32, #tpu.memory_space<vmem>>, vector<8x128xf32>,
    return
  }
  func.func @transform_0(%arg0: i32) -> (i32, i32) {
    %c0_i32 = arith.constant 0 : i32
    %c0_i32_0 = arith.constant 0 : i32
    return %arg0, %c0_i32 : i32, i32
  }
  func.func @transform_1(%arg0: i32) -> (i32, i32) {
    %c0_i32 = arith.constant 0 : i32
    %c0_i32_0 = arith.constant 0 : i32
    %c0_i32_1 = arith.constant 0 : i32
    return %c0_i32, %c0_i32_0 : i32, i32
  }
  func.func @transform_2(%arg0: i32) -> (i32, i32) {
    %c0_i32 = arith.constant 0 : i32
    %c0_i32_0 = arith.constant 0 : i32
    %c0_i32_1 = arith.constant 0 : i32
    return %c0_i32, %c0_i32_0 : i32, i32
  }
  func.func @transform_3(%arg0: i32) -> (i32, i32) {
    %c0_i32 = arith.constant 0 : i32
    %c0_i32_0 = arith.constant 0 : i32
    %c0_i32_1 = arith.constant 0 : i32
    return %c0_i32, %c0_i32_0 : i32, i32
  }
  func.func @transform_4(%arg0: i32) -> (i32, i32) {
    %c0_i32 = arith.constant 0 : i32
    %c0_i32_0 = arith.constant 0 : i32
    %c0_i32_1 = arith.constant 0 : i32
    return %c0_i32, %c0_i32_0 : i32, i32
  }
  func.func @transform_5(%arg0: i32) -> (i32, i32) {
    %c0_i32 = arith.constant 0 : i32
    %c0_i32_0 = arith.constant 0 : i32
    %c0_i32_1 = arith.constant 0 : i32
    return %c0_i32, %c0_i32_0 : i32, i32
  }
  func.func @transform_6(%arg0: i32) -> (i32, i32) {
    %c0_i32 = arith.constant 0 : i32
    %c0_i32_0 = arith.constant 0 : i32
    %c0_i32_1 = arith.constant 0 : i32
    return %c0_i32, %c0_i32_0 : i32, i32
  }
  func.func @transform_7(%arg0: i32) -> (i32, i32) {
    %c0_i32 = arith.constant 0 : i32
    %c0_i32_0 = arith.constant 0 : i32
    return %arg0, %c0_i32 : i32, i32
  }
}

</mosaic_0001>

<llo_original>
// kernel: _lambda_.1
$region0: #{_lambda_.1}
  #allocation0 [shape = 'u32[]', space=smem, size = 0x4, offset = 0x4, fixed_abs, tag = 'smem constant byte address 0x4 - core index']
  #allocation1 [shape = 'u32[144,128]{1,0:T(1,128)}', space=vmem, size = 0x12000, scoped, tag = 'internal scratch']
  %s0 = inlined_call_operand.hbm [shape: f32[8,9], index: 0, kind: input, shape index: {}]
  %s1 = inlined_call_operand.vmem [shape: bf16[9,128], index: 1, kind: input, shape index: {}]
  %s2 = inlined_call_operand.vmem [shape: f32[1,128], index: 2, kind: input, shape index: {}]
  %s3 = inlined_call_operand.hbm [shape: bf16[128,128], index: 3, kind: input, shape index: {}]
  %s4 = inlined_call_operand.vmem [shape: f32[1,128], index: 4, kind: input, shape index: {}]
  %s5 = inlined_call_operand.hbm [shape: bf16[128,128], index: 5, kind: input, shape index: {}]
  %s6 = inlined_call_operand.vmem [shape: f32[1,128], index: 6, kind: input, shape index: {}]
  %s7 = inlined_call_operand.hbm [shape: f32[8,128], index: 7, kind: output, shape index: {}]
  %s8 = sld [smem:[#allocation0]]
  $region50: #{_lambda_.1} parent=0
    _
  %s10 = ssub.s32 1, %s8
  %s11 = scalar_select 0, %s10, %s8
  $region1: #{_lambda_.1} parent=0
    #allocation2 [shape = 'u8[4096]{0}', space=vmem, size = 0x1000, scoped, tag = 'input window, operand 0, single buffered']
    #allocation3 [shape = 's32[1]{0}', space=sflag, size = 0x4, scoped, tag = 'scoped memory for _lambda_.1']
    #allocation4 [shape = 's32[1]{0}', space=sflag, size = 0x4, scoped, tag = 'scoped memory for _lambda_.1']
    #allocation5 [shape = 'u8[32768]{0}', space=vmem, size = 0x8000, scoped, tag = 'input window, operand 3, single buffered']
    #allocation6 [shape = 's32[1]{0}', space=sflag, size = 0x4, scoped, tag = 'scoped memory for _lambda_.1']
    #allocation7 [shape = 'u8[32768]{0}', space=vmem, size = 0x8000, scoped, tag = 'input window, operand 5, single buffered']
    #allocation8 [shape = 'u8[4096]{0}', space=vmem, size = 0x1000, scoped, tag = 'output window, operand 0, single buffered']
    %12 = vsyncpa [#allocation3], 0
    %13 = vsyncpa [#allocation6], 0
    %14 = vsyncpa [#allocation4], 0
    // Predicated region
    $region2: #{_lambda_.1} parent=1 // pred_check
      _
    $region3: #{_lambda_.1} parent=1 // pred_check_branch
      %16 = sbr.rel (0) target = $region5
    $region4: #{_lambda_.1} parent=1 // pred_region
      %s18 = ssub.s32 128, 128
      %19 = vsyncadd [#allocation3], %s18
      %s21 = sshll.u32 [#allocation2], 4
      %s22 = int_to_ptr.vmem [resolvable:$true] %s21
      %24 = dma.hbm_to_vmem [thread:$0]  %s0, 128, %s22, [#allocation3]
    $region5: #{_lambda_.1} parent=1 // pred_fallthru
      _
    // Predicated region
    $region6: #{_lambda_.1} parent=1 // pred_check
      _
    $region7: #{_lambda_.1} parent=1 // pred_check_branch
      %26 = sbr.rel (0) target = $region9
    $region8: #{_lambda_.1} parent=1 // pred_region
      _
    $region9: #{_lambda_.1} parent=1 // pred_fallthru
      _
    // Predicated region
    $region10: #{_lambda_.1} parent=1 // pred_check
      _
    $region11: #{_lambda_.1} parent=1 // pred_check_branch
      %28 = sbr.rel (0) target = $region13
    $region12: #{_lambda_.1} parent=1 // pred_region
      _
    $region13: #{_lambda_.1} parent=1 // pred_fallthru
      _
    // Predicated region
    $region14: #{_lambda_.1} parent=1 // pred_check
      _
    $region15: #{_lambda_.1} parent=1 // pred_check_branch
      %30 = sbr.rel (0) target = $region17
    $region16: #{_lambda_.1} parent=1 // pred_region
      %s32 = ssub.s32 1024, 1024
      %33 = vsyncadd [#allocation6], %s32
      %s34 = sshll.u32 [#allocation5], 4
      %s35 = int_to_ptr.vmem [resolvable:$true] %s34
      %40 = dma.hbm_to_vmem [thread:$0]  %s3, 1024, %s35, [#allocation6], 64, 64, 4
    $region17: #{_lambda_.1} parent=1 // pred_fallthru
      _
    // Predicated region
    $region18: #{_lambda_.1} parent=1 // pred_check
      _
    $region19: #{_lambda_.1} parent=1 // pred_check_branch
      %42 = sbr.rel (0) target = $region21
    $region20: #{_lambda_.1} parent=1 // pred_region
      _
    $region21: #{_lambda_.1} parent=1 // pred_fallthru
      _
    // Predicated region
    $region22: #{_lambda_.1} parent=1 // pred_check
      _
    $region23: #{_lambda_.1} parent=1 // pred_check_branch
      %44 = sbr.rel (0) target = $region25
    $region24: #{_lambda_.1} parent=1 // pred_region
      %s46 = ssub.s32 1024, 1024
      %47 = vsyncadd [#allocation6], %s46
      %s48 = sshll.u32 [#allocation7], 4
      %s49 = int_to_ptr.vmem [resolvable:$true] %s48
      %54 = dma.hbm_to_vmem [thread:$0]  %s5, 1024, %s49, [#allocation6], 64, 64, 4
    $region25: #{_lambda_.1} parent=1 // pred_fallthru
      _
    // Predicated region
    $region26: #{_lambda_.1} parent=1 // pred_check
      _
    $region27: #{_lambda_.1} parent=1 // pred_check_branch
      %56 = sbr.rel (0) target = $region29
    $region28: #{_lambda_.1} parent=1 // pred_region
      _
    $region29: #{_lambda_.1} parent=1 // pred_fallthru
      _
    // Predicated region
    $region30: #{_lambda_.1} parent=1 // pred_check
      _
    $region31: #{_lambda_.1} parent=1 // pred_check_branch
      %58 = sbr.rel (0) target = $region33
    $region32: #{_lambda_.1} parent=1 // pred_region
      %59 = dma.done [#allocation3], 128
    $region33: #{_lambda_.1} parent=1 // pred_fallthru
      _
    // Predicated region
    $region34: #{_lambda_.1} parent=1 // pred_check
      _
    $region35: #{_lambda_.1} parent=1 // pred_check_branch
      %61 = sbr.rel (0) target = $region37
    $region36: #{_lambda_.1} parent=1 // pred_region
      %62 = dma.done [#allocation6], 1024
    $region37: #{_lambda_.1} parent=1 // pred_fallthru
      _
    // Predicated region
    $region38: #{_lambda_.1} parent=1 // pred_check
      _
    $region39: #{_lambda_.1} parent=1 // pred_check_branch
      %64 = sbr.rel (0) target = $region41
    $region40: #{_lambda_.1} parent=1 // pred_region
      %65 = dma.done [#allocation6], 1024
    $region41: #{_lambda_.1} parent=1 // pred_fallthru
      _
    %v67 = vld [vmem:[#allocation2] sm:$0xff]
    %v68 = vpack.c.bf16 %v67, %v67
    %v69 = vld [vmem:[%s1] sm:$0xf]
    %v70 = vld [vmem:[%s1 + $0x4] sm:$0x1]
    %v71 = vld [vmem:[%s2] sm:$0x1]
    %v73 = vlaneseq
    %v74 = vshrl.u32 %v73, 7
    %v75 = vsub.s32 0, %v74
    %v76 = vrot.slane %v71, %v75
    %v80 = vunpack.c.l.b16 %v69
    %v81 = vunpack.c.l.b16 %v70
    %v82 = vpack.c.b16 %v81, %v80
    %vm83 = vcmask 72704
    %v85 = vsel %vm83, %v68, 0
    %vm87 = vcmask 1043456
    %vm88 = vcmask 1044480
    %v89 = vsel %vm87, 4294967295, 65535
    %v90 = vsel %vm88, %v89, 0
    %v92 = vand.u32 %v82, %v90
    %94 = vmatprep.subr.bf16.mxu0 0
    %95 = vmatpush1.bf16.msra.mxu0 %v92
    %96 = vmatprep.subr.bf16.mxu0 0
    %97 = vmatpush1.bf16.msra.mxu0 0
    %98 = vmatprep.subr.bf16.mxu0 0
    %99 = vmatpush1.bf16.msra.mxu0 0
    %100 = vmatprep.subr.bf16.mxu0 0
    %101 = vmatpush1.bf16.msra.mxu0 0
    %102 = vmatprep.subr.bf16.mxu0 0
    %103 = vmatpush1.bf16.msra.mxu0 0
    %104 = vmatprep.subr.bf16.mxu0 0
    %105 = vmatpush1.bf16.msra.mxu0 0
    %106 = vmatprep.subr.bf16.mxu0 0
    %107 = vmatpush1.bf16.msra.mxu0 0
    %108 = vmatprep.subr.bf16.mxu0 0
    %109 = vmatpush1.bf16.msra.mxu0 0
    %110 = vmatprep.subr.bf16.mxu0 0
    %111 = vmatpush1.bf16.msra.mxu0 0
    %112 = vmatprep.subr.bf16.mxu0 0
    %113 = vmatpush1.bf16.msra.mxu0 0
    %114 = vmatprep.subr.bf16.mxu0 0
    %115 = vmatpush1.bf16.msra.mxu0 0
    %116 = vmatprep.subr.bf16.mxu0 0
    %117 = vmatpush1.bf16.msra.mxu0 0
    %118 = vmatprep.subr.bf16.mxu0 0
    %119 = vmatpush1.bf16.msra.mxu0 0
    %120 = vmatprep.subr.bf16.mxu0 0
    %121 = vmatpush1.bf16.msra.mxu0 0
    %122 = vmatprep.subr.bf16.mxu0 0
    %123 = vmatpush1.bf16.msra.mxu0 0
    %124 = vmatprep.subr.bf16.mxu0 0
    %125 = vmatpush1.bf16.msra.mxu0 0
    %126 = vmatprep.mubr.bf16.mxu0 0
    %127 = vmatmul.mubr.bf16.gmra.mrb[0].mxu0 %v85
    %v128 = vpop.f32.mrb[0].mxu0
    %v129 = vadd.f32 %v76, %v128
    %v130 = vpop.f32.mrb[0].mxu0
    %v131 = vpop.f32.mrb[0].mxu0
    %v132 = vpop.f32.mrb[0].mxu0
    %133 = vdwg.mxu0
    %v134 = vmax.f32 %v129, 0.0
    %v135 = vpack.c.bf16 %v134, %v134
    %v136 = vld [vmem:[#allocation5] sm:$0xf]
    %v137 = vld [vmem:[#allocation5 + $0x4] sm:$0xf]
    %v138 = vld [vmem:[#allocation5 + $0x8] sm:$0xf]
    %v139 = vld [vmem:[#allocation5 + $0xc] sm:$0xf]
    %v140 = vld [vmem:[#allocation5 + $0x10] sm:$0xf]
    %v141 = vld [vmem:[#allocation5 + $0x14] sm:$0xf]
    %v142 = vld [vmem:[#allocation5 + $0x18] sm:$0xf]
    %v143 = vld [vmem:[#allocation5 + $0x1c] sm:$0xf]
    %v144 = vld [vmem:[#allocation5 + $0x20] sm:$0xf]
    %v145 = vld [vmem:[#allocation5 + $0x24] sm:$0xf]
    %v146 = vld [vmem:[#allocation5 + $0x28] sm:$0xf]
    %v147 = vld [vmem:[#allocation5 + $0x2c] sm:$0xf]
    %v148 = vld [vmem:[#allocation5 + $0x30] sm:$0xf]
    %v149 = vld [vmem:[#allocation5 + $0x34] sm:$0xf]
    %v150 = vld [vmem:[#allocation5 + $0x38] sm:$0xf]
    %v151 = vld [vmem:[#allocation5 + $0x3c] sm:$0xf]
    %v152 = vld [vmem:[%s4] sm:$0x1]
    %v154 = vlaneseq
    %v155 = vshrl.u32 %v154, 7
    %v156 = vsub.s32 0, %v155
    %v157 = vrot.slane %v152, %v156
    %v175 = vunpack.c.l.b16 %v136
    %v176 = vunpack.c.l.b16 %v137
    %v177 = vunpack.c.l.b16 %v138
    %v178 = vunpack.c.l.b16 %v139
    %v179 = vunpack.c.l.b16 %v140
    %v180 = vunpack.c.l.b16 %v141
    %v181 = vunpack.c.l.b16 %v142
    %v182 = vunpack.c.l.b16 %v143
    %v183 = vunpack.c.l.b16 %v144
    %v184 = vunpack.c.l.b16 %v145
    %v185 = vunpack.c.l.b16 %v146
    %v186 = vunpack.c.l.b16 %v147
    %v187 = vunpack.c.l.b16 %v148
    %v188 = vunpack.c.l.b16 %v149
    %v189 = vunpack.c.l.b16 %v150
    %v190 = vunpack.c.l.b16 %v151
    %v191 = vpack.c.b16 %v176, %v175
    %v192 = vpack.c.b16 %v178, %v177
    %v193 = vpack.c.b16 %v180, %v179
    %v194 = vpack.c.b16 %v182, %v181
    %v195 = vpack.c.b16 %v184, %v183
    %v196 = vpack.c.b16 %v186, %v185
    %v197 = vpack.c.b16 %v188, %v187
    %v198 = vpack.c.b16 %v190, %v189
    %207 = vmatprep.subr.bf16.mxu0 0
    %208 = vmatpush1.bf16.msra.mxu0 %v191
    %209 = vmatprep.subr.bf16.mxu0 0
    %210 = vmatpush1.bf16.msra.mxu0 %v192
    %211 = vmatprep.subr.bf16.mxu0 0
    %212 = vmatpush1.bf16.msra.mxu0 %v193
    %213 = vmatprep.subr.bf16.mxu0 0
    %214 = vmatpush1.bf16.msra.mxu0 %v194
    %215 = vmatprep.subr.bf16.mxu0 0
    %216 = vmatpush1.bf16.msra.mxu0 %v195
    %217 = vmatprep.subr.bf16.mxu0 0
    %218 = vmatpush1.bf16.msra.mxu0 %v196
    %219 = vmatprep.subr.bf16.mxu0 0
    %220 = vmatpush1.bf16.msra.mxu0 %v197
    %221 = vmatprep.subr.bf16.mxu0 0
    %222 = vmatpush1.bf16.msra.mxu0 %v198
    %223 = vmatprep.subr.bf16.mxu0 0
    %224 = vmatpush1.bf16.msra.mxu0 0
    %225 = vmatprep.subr.bf16.mxu0 0
    %226 = vmatpush1.bf16.msra.mxu0 0
    %227 = vmatprep.subr.bf16.mxu0 0
    %228 = vmatpush1.bf16.msra.mxu0 0
    %229 = vmatprep.subr.bf16.mxu0 0
    %230 = vmatpush1.bf16.msra.mxu0 0
    %231 = vmatprep.subr.bf16.mxu0 0
    %232 = vmatpush1.bf16.msra.mxu0 0
    %233 = vmatprep.subr.bf16.mxu0 0
    %234 = vmatpush1.bf16.msra.mxu0 0
    %235 = vmatprep.subr.bf16.mxu0 0
    %236 = vmatpush1.bf16.msra.mxu0 0
    %237 = vmatprep.subr.bf16.mxu0 0
    %238 = vmatpush1.bf16.msra.mxu0 0
    %239 = vmatprep.mubr.bf16.mxu0 0
    %240 = vmatmul.mubr.bf16.gmra.mrb[0].mxu0 %v135
    %v241 = vpop.f32.mrb[0].mxu0
    %v242 = vadd.f32 %v157, %v241
    %v243 = vpop.f32.mrb[0].mxu0
    %v244 = vpop.f32.mrb[0].mxu0
    %v245 = vpop.f32.mrb[0].mxu0
    %246 = vdwg.mxu0
    %v247 = vmax.f32 %v242, 0.0
    %v248 = vpack.c.bf16 %v247, %v247
    %v249 = vld [vmem:[#allocation7] sm:$0xf]
    %v250 = vld [vmem:[#allocation7 + $0x4] sm:$0xf]
    %v251 = vld [vmem:[#allocation7 + $0x8] sm:$0xf]
    %v252 = vld [vmem:[#allocation7 + $0xc] sm:$0xf]
    %v253 = vld [vmem:[#allocation7 + $0x10] sm:$0xf]
    %v254 = vld [vmem:[#allocation7 + $0x14] sm:$0xf]
    %v255 = vld [vmem:[#allocation7 + $0x18] sm:$0xf]
    %v256 = vld [vmem:[#allocation7 + $0x1c] sm:$0xf]
    %v257 = vld [vmem:[#allocation7 + $0x20] sm:$0xf]
    %v258 = vld [vmem:[#allocation7 + $0x24] sm:$0xf]
    %v259 = vld [vmem:[#allocation7 + $0x28] sm:$0xf]
    %v260 = vld [vmem:[#allocation7 + $0x2c] sm:$0xf]
    %v261 = vld [vmem:[#allocation7 + $0x30] sm:$0xf]
    %v262 = vld [vmem:[#allocation7 + $0x34] sm:$0xf]
    %v263 = vld [vmem:[#allocation7 + $0x38] sm:$0xf]
    %v264 = vld [vmem:[#allocation7 + $0x3c] sm:$0xf]
    %v265 = vld [vmem:[%s6] sm:$0x1]
    %v267 = vlaneseq
    %v268 = vshrl.u32 %v267, 7
    %v269 = vsub.s32 0, %v268
    %v270 = vrot.slane %v265, %v269
    %v288 = vunpack.c.l.b16 %v249
    %v289 = vunpack.c.l.b16 %v250
    %v290 = vunpack.c.l.b16 %v251
    %v291 = vunpack.c.l.b16 %v252
    %v292 = vunpack.c.l.b16 %v253
    %v293 = vunpack.c.l.b16 %v254
    %v294 = vunpack.c.l.b16 %v255
    %v295 = vunpack.c.l.b16 %v256
    %v296 = vunpack.c.l.b16 %v257
    %v297 = vunpack.c.l.b16 %v258
    %v298 = vunpack.c.l.b16 %v259
    %v299 = vunpack.c.l.b16 %v260
    %v300 = vunpack.c.l.b16 %v261
    %v301 = vunpack.c.l.b16 %v262
    %v302 = vunpack.c.l.b16 %v263
    %v303 = vunpack.c.l.b16 %v264
    %v304 = vpack.c.b16 %v289, %v288
    %v305 = vpack.c.b16 %v291, %v290
    %v306 = vpack.c.b16 %v293, %v292
    %v307 = vpack.c.b16 %v295, %v294
    %v308 = vpack.c.b16 %v297, %v296
    %v309 = vpack.c.b16 %v299, %v298
    %v310 = vpack.c.b16 %v301, %v300
    %v311 = vpack.c.b16 %v303, %v302
    %320 = vmatprep.subr.bf16.mxu0 0
    %321 = vmatpush1.bf16.msra.mxu0 %v304
    %322 = vmatprep.subr.bf16.mxu0 0
    %323 = vmatpush1.bf16.msra.mxu0 %v305
    %324 = vmatprep.subr.bf16.mxu0 0
    %325 = vmatpush1.bf16.msra.mxu0 %v306
    %326 = vmatprep.subr.bf16.mxu0 0
    %327 = vmatpush1.bf16.msra.mxu0 %v307
    %328 = vmatprep.subr.bf16.mxu0 0
    %329 = vmatpush1.bf16.msra.mxu0 %v308
    %330 = vmatprep.subr.bf16.mxu0 0
    %331 = vmatpush1.bf16.msra.mxu0 %v309
    %332 = vmatprep.subr.bf16.mxu0 0
    %333 = vmatpush1.bf16.msra.mxu0 %v310
    %334 = vmatprep.subr.bf16.mxu0 0
    %335 = vmatpush1.bf16.msra.mxu0 %v311
    %336 = vmatprep.subr.bf16.mxu0 0
    %337 = vmatpush1.bf16.msra.mxu0 0
    %338 = vmatprep.subr.bf16.mxu0 0
    %339 = vmatpush1.bf16.msra.mxu0 0
    %340 = vmatprep.subr.bf16.mxu0 0
    %341 = vmatpush1.bf16.msra.mxu0 0
    %342 = vmatprep.subr.bf16.mxu0 0
    %343 = vmatpush1.bf16.msra.mxu0 0
    %344 = vmatprep.subr.bf16.mxu0 0
    %345 = vmatpush1.bf16.msra.mxu0 0
    %346 = vmatprep.subr.bf16.mxu0 0
    %347 = vmatpush1.bf16.msra.mxu0 0
    %348 = vmatprep.subr.bf16.mxu0 0
    %349 = vmatpush1.bf16.msra.mxu0 0
    %350 = vmatprep.subr.bf16.mxu0 0
    %351 = vmatpush1.bf16.msra.mxu0 0
    %352 = vmatprep.mubr.bf16.mxu0 0
    %353 = vmatmul.mubr.bf16.gmra.mrb[0].mxu0 %v248
    %v354 = vpop.f32.mrb[0].mxu0
    %v355 = vadd.f32 %v270, %v354
    %v356 = vpop.f32.mrb[0].mxu0
    %v357 = vpop.f32.mrb[0].mxu0
    %v358 = vpop.f32.mrb[0].mxu0
    %359 = vdwg.mxu0
    %360 = vst [vmem:[#allocation8] sm:$0xff] %v355
    // Predicated region
    $region42: #{_lambda_.1} parent=1 // pred_check
      _
    $region43: #{_lambda_.1} parent=1 // pred_check_branch
      %362 = sbr.rel (0) target = $region45
    $region44: #{_lambda_.1} parent=1 // pred_region
      %s364 = ssub.s32 128, 128
      %365 = vsyncadd [#allocation4], %s364
      %s367 = sshll.u32 [#allocation8], 4
      %s368 = int_to_ptr.vmem [resolvable:$true] %s367
      %370 = dma.vmem_to_hbm [thread:$0]  %s368, 128, %s7, [#allocation4]
    $region45: #{_lambda_.1} parent=1 // pred_fallthru
      _
    // Predicated region
    $region46: #{_lambda_.1} parent=1 // pred_check
      _
    $region47: #{_lambda_.1} parent=1 // pred_check_branch
      %372 = sbr.rel (0) target = $region49
    $region48: #{_lambda_.1} parent=1 // pred_region
      %373 = dma.done [#allocation4], 128
    $region49: #{_lambda_.1} parent=1 // pred_fallthru
      _
    %374 = vsyncpa [#allocation3], 1
    %375 = vsyncpa [#allocation6], 1
    %376 = vsyncpa [#allocation4], 1

</llo_original>
